<compile_context>
chip_gen: v7x
topology: tpu7x:2x2x1
jax: 0.10.0
libtpu: 0.0.40
codegen_flags: <defaults>
</compile_context>

<pallas_src>
import functools

import jax
import jax.numpy as jnp
from jax.experimental import pallas as pl
from jax.experimental.pallas import tpu as pltpu


_VMEM_BUDGET = 40 * 1024 * 1024       # conservative: v7x has 64 MiB per TC
_VMEM_LIMIT_CAP = 48 * 1024 * 1024


def _round_up(x, m):
    return ((x + m - 1) // m) * m


def _pick_dim(dim, align, max_tile):
    """Pad `dim` up and pick a tile size that divides the padded dim exactly."""
    if dim <= max_tile:
        padded = _round_up(dim, align)
        return padded, padded          # single tile covering the (padded) dim
    padded = _round_up(dim, max_tile)
    return padded, max_tile


def _pe_kernel_resident(p_ref, w_ref, b_ref, o_ref):
    # Weight and bias are fully VMEM-resident; single MXU matmul per M tile,
    # no accumulator scratch, no pl.when phases.
    acc = jnp.dot(p_ref[...], w_ref[...], preferred_element_type=jnp.float32)
    o_ref[...] = (acc + b_ref[...].astype(jnp.float32)).astype(o_ref.dtype)


def _pe_kernel_tiled(p_ref, w_ref, b_ref, o_ref, acc_ref):
    # General K/E-tiled path with f32 accumulator; bias folded into the init.
    k = pl.program_id(2)

    @pl.when(k == 0)
    def _init():
        acc_ref[...] = jnp.broadcast_to(
            b_ref[...].astype(jnp.float32), acc_ref.shape)

    acc_ref[...] += jnp.dot(p_ref[...], w_ref[...],
                            preferred_element_type=jnp.float32)

    @pl.when(k == pl.num_programs(2) - 1)
    def _finalize():
        o_ref[...] = acc_ref[...].astype(o_ref.dtype)


@functools.partial(jax.jit, static_argnames=("patch_size", "compute_dtype"))
def patch_embedding(x, weight, bias, *, patch_size, compute_dtype=None):
    """x: (B, C, H, W); weight: (E, C, P, P); bias: (E,) -> (B, N, E)."""
    B, C, H, W = x.shape
    E = weight.shape[0]
    P = patch_size
    assert H % P == 0 and W % P == 0
    nH, nW = H // P, W // P
    N = nH * nW
    K = C * P * P
    M = B * N

    out_dtype = x.dtype
    cdtype = jnp.dtype(compute_dtype) if compute_dtype is not None else jnp.dtype(x.dtype)
    csize = cdtype.itemsize
    osize = jnp.dtype(out_dtype).itemsize
    bsize = jnp.dtype(bias.dtype).itemsize
    # Sublane packing of the compute dtype drives the M alignment.
    m_align = {4: 8, 2: 16, 1: 32}.get(csize, 8)

    # --- im2col (stride == kernel conv -> plain GEMM). -----------------------
    # Patch flattened in (C, ph, pw) order to match Conv2d weight (E, C, P, P).
    # TODO(synk): the transpose stays a host-side XLA op; allow_input_fusion
    # below lets XLA fold it (plus pad/cast) into the Pallas input DMA when
    # possible; a fully in-kernel im2col would need a Mosaic-unfriendly
    # small-P 6-D transpose.
    patches = x.reshape(B, C, nH, P, nW, P)
    patches = patches.transpose(0, 2, 4, 1, 3, 5).reshape(M, K).astype(cdtype)
    w2d = weight.reshape(E, K).T.astype(cdtype)             # (K, E)
    b2d = bias.reshape(1, E)                                 # (1, E)

    # Lane-dense padding targets: K, E -> multiples of 128.
    Kp = _round_up(K, 128)
    Ep = _round_up(E, 128)

    # --- Resident-weight decision + M tile choice (VMEM-budget aware). -------
    resident_fixed = 2 * Kp * Ep * csize + 2 * Ep * bsize    # weight + bias (x2 buf)

    def _m_tile_bytes(tm):
        return 2 * tm * Kp * csize + 2 * tm * Ep * osize     # patches + out (x2 buf)

    Mp, tm = None, None
    if resident_fixed + _m_tile_bytes(m_align) <= _VMEM_BUDGET:
        for cap in (1024, 512, 256, 128):
            cand_Mp, cand_tm = _pick_dim(M, m_align, cap)
            if resident_fixed + _m_tile_bytes(cand_tm) <= _VMEM_BUDGET:
                Mp, tm = cand_Mp, cand_tm
                break

    if tm is not None:
        # ----- Fast path: weight + bias fully VMEM-resident, 1-D grid over M.
        if (Mp, Kp) != (M, K):
            patches = jnp.pad(patches, ((0, Mp - M), (0, Kp - K)))
        if (Kp, Ep) != (K, E):
            w2d = jnp.pad(w2d, ((0, Kp - K), (0, Ep - E)))
        if Ep != E:
            b2d = jnp.pad(b2d, ((0, 0), (0, Ep - E)))

        vmem_need = resident_fixed + _m_tile_bytes(tm)
        cost = pl.CostEstimate(
            flops=2 * Mp * Kp * Ep,
            transcendentals=0,
            bytes_accessed=(Mp * Kp * csize + Kp * Ep * csize
                            + Ep * bsize + Mp * Ep * osize),
        )

        out = pl.pallas_call(
            _pe_kernel_resident,
            out_shape=jax.ShapeDtypeStruct((Mp, Ep), out_dtype),
            grid_spec=pltpu.PrefetchScalarGridSpec(
                num_scalar_prefetch=0,
                grid=(Mp // tm,),
                in_specs=[
                    pl.BlockSpec((tm, Kp), lambda i: (i, 0)),    # patches tile
                    pl.BlockSpec((Kp, Ep), lambda i: (0, 0)),    # resident weight
                    pl.BlockSpec((1, Ep), lambda i: (0, 0)),     # resident bias
                ],
                out_specs=pl.BlockSpec((tm, Ep), lambda i: (i, 0)),
            ),
            compiler_params=pltpu.CompilerParams(
                dimension_semantics=("parallel",),               # megacore splits M
                vmem_limit_bytes=min(max(int(vmem_need * 1.5), 16 * 1024 * 1024),
                                     _VMEM_LIMIT_CAP),
                allow_input_fusion=[True, False, False],
            ),
            cost_estimate=cost,
        )(patches, w2d, b2d)
    else:
        # ----- Fallback: K/E-tiled GEMM with f32 accumulator (huge K*E). -----
        Mp, tm = _pick_dim(M, m_align, 512)
        Ep, tn = _pick_dim(E, 128, 256)
        Kp, tk = _pick_dim(K, 128, 1024)

        patches = jnp.pad(patches, ((0, Mp - M), (0, Kp - K)))
        w2d = jnp.pad(w2d, ((0, Kp - K), (0, Ep - E)))
        b2d = jnp.pad(b2d, ((0, 0), (0, Ep - E)))

        grid = (Mp // tm, Ep // tn, Kp // tk)
        vmem_need = (2 * tm * tk * csize + 3 * tk * tn * csize + 2 * tn * bsize
                     + 2 * tm * tn * osize + tm * tn * 4)
        cost = pl.CostEstimate(
            flops=2 * Mp * Kp * Ep,
            transcendentals=0,
            bytes_accessed=((Mp * Kp * csize) * (Ep // tn)       # patches per E tile
                            + (Kp * Ep * csize) * (Mp // tm)     # weight re-streamed
                            + Ep * bsize + Mp * Ep * osize),
        )

        out = pl.pallas_call(
            _pe_kernel_tiled,
            out_shape=jax.ShapeDtypeStruct((Mp, Ep), out_dtype),
            grid_spec=pltpu.PrefetchScalarGridSpec(
                num_scalar_prefetch=0,
                grid=grid,
                in_specs=[
                    pl.BlockSpec((tm, tk), lambda i, j, k: (i, k)),   # patches
                    pl.BlockSpec((tk, tn), lambda i, j, k: (k, j),
                                 pipeline_mode=pl.Buffered(3)),       # weight
                    pl.BlockSpec((1, tn), lambda i, j, k: (0, j)),    # bias
                ],
                out_specs=pl.BlockSpec((tm, tn), lambda i, j, k: (i, j)),
                scratch_shapes=[pltpu.VMEM((tm, tn), jnp.float32)],
            ),
            compiler_params=pltpu.CompilerParams(
                dimension_semantics=("parallel", "parallel", "arbitrary"),
                vmem_limit_bytes=min(max(int(vmem_need * 1.5), 16 * 1024 * 1024),
                                     _VMEM_LIMIT_CAP),
                allow_input_fusion=[True, False, False],
            ),
            cost_estimate=cost,
        )(patches, w2d, b2d)

    return out[:M, :E].reshape(B, N, E)


if __name__ == "__main__":
    # Small shapes consistent with the module: img=16, patch=4, C=4, E=32.
    B, C, H, W = 2, 4, 16, 16
    P, E = 4, 32

    key = jax.random.PRNGKey(0)
    kx, kw, kb = jax.random.split(key, 3)
    x = jax.random.normal(kx, (B, C, H, W), dtype=jnp.float32)
    # Deterministic synthetic Conv2d params (shape matches nn.Conv2d(C, E, P, P)).
    weight = jax.random.normal(kw, (E, C, P, P), dtype=jnp.float32) * 0.02
    bias = jax.random.normal(kb, (E,), dtype=jnp.float32) * 0.02

    # Reference: plain-JAX strided conv formulation of the PyTorch module.
    ref = jax.lax.conv_general_dilated(
        x, weight, window_strides=(P, P), padding="VALID",
        dimension_numbers=("NCHW", "OIHW", "NCHW")) + bias.reshape(1, E, 1, 1)
    ref = ref.reshape(B, E, -1).transpose(0, 2, 1)

    # f32 compute path (exact parity with the PyTorch conv).
    out = jax.block_until_ready(patch_embedding(x, weight, bias, patch_size=P))
    assert out.shape == (B, (H // P) * (W // P), E)
    assert jnp.allclose(out, ref, atol=1e-4, rtol=1e-4)

    # bf16 operand path with f32 accumulation (perf-recommended for real ViTs).
    out_bf16 = jax.block_until_ready(
        patch_embedding(x, weight, bias, patch_size=P, compute_dtype=jnp.bfloat16))
    assert out_bf16.shape == (B, (H // P) * (W // P), E)
    assert jnp.allclose(out_bf16, ref, atol=3e-2, rtol=3e-2)

    print("KERNEL_OK")
</pallas_src>

<mosaic_0001>
module attributes {stable_mosaic.version = 11 : i64} {
  func.func @_pe_kernel_resident(%arg0: i32, %arg1: memref<32x128xf32, #tpu.memory_space<vmem>>, %arg2: memref<128x128xf32, #tpu.memory_space<vmem>>, %arg3: memref<1x128xf32, #tpu.memory_space<vmem>>, %arg4: memref<32x128xf32, #tpu.memory_space<vmem>>) attributes {dimension_semantics = [#tpu.dimension_semantics<parallel>], iteration_bounds = array<i64: 1>, scalar_prefetch = 0 : i64, scratch_operands = 0 : i64, tpu.core_type = #tpu.core_type<tc>, window_params = [{transform_indices = @transform_0, window_bounds = array<i64: 32, 128>}, {pipeline_mode = #tpu.pipeline_mode<synchronous>, transform_indices = @transform_1, window_bounds = array<i64: 128, 128>}, {pipeline_mode = #tpu.pipeline_mode<synchronous>, transform_indices = @transform_2, window_bounds = array<i64: 1, 128>}, {transform_indices = @transform_3, window_bounds = array<i64: 32, 128>}]} {
    %c0 = arith.constant 0 : index
    %c0_0 = arith.constant 0 : index
    %0 = vector.load %arg1[%c0, %c0_0] : memref<32x128xf32, #tpu.memory_space<vmem>>, vector<32x128xf32>
    %c0_1 = arith.constant 0 : index
    %c0_2 = arith.constant 0 : index
    %1 = vector.load %arg2[%c0_1, %c0_2] : memref<128x128xf32, #tpu.memory_space<vmem>>, vector<128x128xf32>
    %cst = arith.constant dense<0.000000e+00> : vector<32x128xf32>
    %2 = tpu.matmul %0, %1, %cst {dimension_numbers = #tpu.dot_dimension_numbers<[1], [0], [0], [1], [0, 0, 1, 1], [], []>} : vector<32x128xf32>, vector<128x128xf32>, vector<32x128xf32> -> vector<32x128xf32>
    %c0_3 = arith.constant 0 : index
    %c0_4 = arith.constant 0 : index
    %3 = vector.load %arg3[%c0_3, %c0_4] : memref<1x128xf32, #tpu.memory_space<vmem>>, vector<1x128xf32>
    %4 = vector.broadcast %3 : vector<1x128xf32> to vector<32x128xf32>
    %5 = arith.addf %2, %4 : vector<32x128xf32>
    %c0_5 = arith.constant 0 : index
    %c0_6 = arith.constant 0 : index
    %6 = vector.load %arg4[%c0_5, %c0_6] : memref<32x128xf32, #tpu.memory_space<vmem>>, vector<32x128xf32>
    tpu.vector_store %arg4[%c0_5, %c0_6], %5 {strides = array<i32>} : memref<32x128xf32, #tpu.memory_space<vmem>>, vector<32x128xf32>,
    return
  }
  func.func @transform_0(%arg0: i32) -> (i32, i32) {
    %c0_i32 = arith.constant 0 : i32
    %c0_i32_0 = arith.constant 0 : i32
    return %arg0, %c0_i32 : i32, i32
  }
  func.func @transform_1(%arg0: i32) -> (i32, i32) {
    %c0_i32 = arith.constant 0 : i32
    %c0_i32_0 = arith.constant 0 : i32
    %c0_i32_1 = arith.constant 0 : i32
    return %c0_i32, %c0_i32_0 : i32, i32
  }
  func.func @transform_2(%arg0: i32) -> (i32, i32) {
    %c0_i32 = arith.constant 0 : i32
    %c0_i32_0 = arith.constant 0 : i32
    %c0_i32_1 = arith.constant 0 : i32
    return %c0_i32, %c0_i32_0 : i32, i32
  }
  func.func @transform_3(%arg0: i32) -> (i32, i32) {
    %c0_i32 = arith.constant 0 : i32
    %c0_i32_0 = arith.constant 0 : i32
    return %arg0, %c0_i32 : i32, i32
  }
}

</mosaic_0001>

<llo_original>
// kernel: patch_embedding.2
$region0: #{patch_embedding.2}
  #allocation0 [shape = 'u32[]', space=smem, size = 0x4, offset = 0x4, fixed_abs, tag = 'smem constant byte address 0x4 - core index']
  #allocation1 [shape = 'u32[144,128]{1,0:T(1,128)}', space=vmem, size = 0x12000, scoped, tag = 'internal scratch']
  #allocation2 [shape = 'u32[2048]{0}', space=vmem, size = 0x2000, scoped, tag = 'scoped memory for patch_embedding.2']
  #allocation3 [shape = 'u32[2048]{0}', space=vmem, size = 0x2000, scoped, tag = 'scoped memory for patch_embedding.2']
  #allocation4 [shape = 'u32[2048]{0}', space=vmem, size = 0x2000, scoped, tag = 'scoped memory for patch_embedding.2']
  #allocation5 [shape = 'u32[2048]{0}', space=vmem, size = 0x2000, scoped, tag = 'scoped memory for patch_embedding.2']
  #allocation6 [shape = 'u32[2048]{0}', space=vmem, size = 0x2000, scoped, tag = 'scoped memory for patch_embedding.2']
  %s0 = inlined_call_operand.vmem [shape: f32[128,128], index: 0, kind: input, shape index: {}]
  %s1 = inlined_call_operand.vmem [shape: f32[1,128], index: 1, kind: input, shape index: {}]
  %s2 = inlined_call_operand.vmem [shape: f32[32,64], index: 2, kind: input, shape index: {}]
  %s3 = inlined_call_operand.<no memory space> [shape: f32[], index: 3, kind: input, shape index: {}]
  %s4 = inlined_call_operand.hbm [shape: f32[32,128], index: 4, kind: output, shape index: {}]
  %s5 = sld [smem:[#allocation0]]
  $region22: #{patch_embedding.2} parent=0
    _
  %s7 = ssub.s32 1, %s5
  %s8 = scalar_select 0, %s7, %s5
  %v9 = vstv %s3
  $region1: #{patch_embedding.2} parent=0
    #allocation7 [shape = 'u8[16384]{0}', space=vmem, size = 0x4000, scoped, tag = 'output window, operand 0, single buffered']
    #allocation8 [shape = 's32[1]{0}', space=sflag, size = 0x4, scoped, tag = 'scoped memory for patch_embedding.2']
    #allocation9 [shape = 'u8[16384]{0}', space=vmem, size = 0x4000, dematerialized = true, scoped, tag = 'FusionAdapter Buffer %fusion.1 = f32[32,128]{1,0:T(8,128)} fusion(%param_2.1, %param_3), kind=kLoop, calls=%fused_computation.2.clone, metadata={op_name="jit(patch_embedding)/jit(_pad)/pad" stack_frame_id=11}']
    %10 = vsyncpa [#allocation8], 0
    // Predicated region
    $region2: #{patch_embedding.2} parent=1 // pred_check
      _
    $region3: #{patch_embedding.2} parent=1 // pred_check_branch
      %12 = sbr.rel (0) target = $region5
    $region4: #{patch_embedding.2} parent=1 // pred_region
      _
    $region5: #{patch_embedding.2} parent=1 // pred_fallthru
      _
    // Predicated region
    $region6: #{patch_embedding.2} parent=1 // pred_check
      _
    $region7: #{patch_embedding.2} parent=1 // pred_check_branch
      %14 = sbr.rel (0) target = $region9
    $region8: #{patch_embedding.2} parent=1 // pred_region
      _
    $region9: #{patch_embedding.2} parent=1 // pred_fallthru
      _
    // Predicated region
    $region10: #{patch_embedding.2} parent=1 // pred_check
      _
    $region11: #{patch_embedding.2} parent=1 // pred_check_branch
      %16 = sbr.rel (0) target = $region13
    $region12: #{patch_embedding.2} parent=1 // pred_region
      _
    $region13: #{patch_embedding.2} parent=1 // pred_fallthru
      _
    %v17 = vld [vmem:[%s2] sm:$0xff]
    %v18 = vlaneseq
    %v19 = vand.u32 %v18, 127
    %vm21 = vcmp.lt.s32.totalorder %v19, 64
    %v22 = vsel %vm21, %v17, %v9
    %24 = vst [vmem:[#allocation9] sm:$0xff] %v22
    %s25 = scalar_lea.vmem %s2, 8
    %v26 = vld [vmem:[%s25] sm:$0xff]
    %v27 = vlaneseq
    %v28 = vand.u32 %v27, 127
    %vm30 = vcmp.lt.s32.totalorder %v28, 64
    %v31 = vsel %vm30, %v26, %v9
    %s32 = scalar_lea.vmem [#allocation9], 8
    %34 = vst [vmem:[%s32] sm:$0xff] %v31
    %s35 = scalar_lea.vmem %s2, 16
    %v36 = vld [vmem:[%s35] sm:$0xff]
    %v37 = vlaneseq
    %v38 = vand.u32 %v37, 127
    %vm40 = vcmp.lt.s32.totalorder %v38, 64
    %v41 = vsel %vm40, %v36, %v9
    %s42 = scalar_lea.vmem [#allocation9], 16
    %44 = vst [vmem:[%s42] sm:$0xff] %v41
    %s45 = scalar_lea.vmem %s2, 24
    %v46 = vld [vmem:[%s45] sm:$0xff]
    %v47 = vlaneseq
    %v48 = vand.u32 %v47, 127
    %vm50 = vcmp.lt.s32.totalorder %v48, 64
    %v51 = vsel %vm50, %v46, %v9
    %s52 = scalar_lea.vmem [#allocation9], 24
    %54 = vst [vmem:[%s52] sm:$0xff] %v51
    %v55 = vld [vmem:[#allocation9] sm:$0xff]
    %v56 = vld [vmem:[#allocation9 + $0x8] sm:$0xff]
    %v57 = vld [vmem:[#allocation9 + $0x10] sm:$0xff]
    %v58 = vld [vmem:[#allocation9 + $0x18] sm:$0xff]
    %v59 = vld [vmem:[%s0] sm:$0xff]
    %v60 = vld [vmem:[%s0 + $0x8] sm:$0xff]
    %v61 = vld [vmem:[%s0 + $0x10] sm:$0xff]
    %v62 = vld [vmem:[%s0 + $0x18] sm:$0xff]
    %v63 = vld [vmem:[%s0 + $0x20] sm:$0xff]
    %v64 = vld [vmem:[%s0 + $0x28] sm:$0xff]
    %v65 = vld [vmem:[%s0 + $0x30] sm:$0xff]
    %v66 = vld [vmem:[%s0 + $0x38] sm:$0xff]
    %v67 = vld [vmem:[%s0 + $0x40] sm:$0xff]
    %v68 = vld [vmem:[%s0 + $0x48] sm:$0xff]
    %v69 = vld [vmem:[%s0 + $0x50] sm:$0xff]
    %v70 = vld [vmem:[%s0 + $0x58] sm:$0xff]
    %v71 = vld [vmem:[%s0 + $0x60] sm:$0xff]
    %v72 = vld [vmem:[%s0 + $0x68] sm:$0xff]
    %v73 = vld [vmem:[%s0 + $0x70] sm:$0xff]
    %v74 = vld [vmem:[%s0 + $0x78] sm:$0xff]
    %v75 = vld [vmem:[%s1] sm:$0x1]
    %v77 = vlaneseq
    %v78 = vshrl.u32 %v77, 7
    %v79 = vsub.s32 0, %v78
    %v80 = vrot.slane %v75, %v79
    %82 = vmatprep.subr.mxu0 0.0
    %83 = vmatpush1.msra.mxu0 %v59
    %84 = vmatprep.subr.mxu0 0.0
    %85 = vmatpush1.msra.mxu0 %v60
    %86 = vmatprep.subr.mxu0 0.0
    %87 = vmatpush1.msra.mxu0 %v61
    %88 = vmatprep.subr.mxu0 0.0
    %89 = vmatpush1.msra.mxu0 %v62
    %90 = vmatprep.subr.mxu0 0.0
    %91 = vmatpush1.msra.mxu0 %v63
    %92 = vmatprep.subr.mxu0 0.0
    %93 = vmatpush1.msra.mxu0 %v64
    %94 = vmatprep.subr.mxu0 0.0
    %95 = vmatpush1.msra.mxu0 %v65
    %96 = vmatprep.subr.mxu0 0.0
    %97 = vmatpush1.msra.mxu0 %v66
    %98 = vmatprep.subr.mxu0 0.0
    %99 = vmatpush1.msra.mxu0 %v67
    %100 = vmatprep.subr.mxu0 0.0
    %101 = vmatpush1.msra.mxu0 %v68
    %102 = vmatprep.subr.mxu0 0.0
    %103 = vmatpush1.msra.mxu0 %v69
    %104 = vmatprep.subr.mxu0 0.0
    %105 = vmatpush1.msra.mxu0 %v70
    %106 = vmatprep.subr.mxu0 0.0
    %107 = vmatpush1.msra.mxu0 %v71
    %108 = vmatprep.subr.mxu0 0.0
    %109 = vmatpush1.msra.mxu0 %v72
    %110 = vmatprep.subr.mxu0 0.0
    %111 = vmatpush1.msra.mxu0 %v73
    %112 = vmatprep.subr.mxu0 0.0
    %113 = vmatpush1.msra.mxu0 %v74
    %114 = vmatprep.subr.mxu0 0.0
    %115 = vmatpush1.msra.mxu0 0.0
    %116 = vmatprep.subr.mxu0 0.0
    %117 = vmatpush1.msra.mxu0 0.0
    %118 = vmatprep.subr.mxu0 0.0
    %119 = vmatpush1.msra.mxu0 0.0
    %120 = vmatprep.subr.mxu0 0.0
    %121 = vmatpush1.msra.mxu0 0.0
    %122 = vmatprep.subr.mxu0 0.0
    %123 = vmatpush1.msra.mxu0 0.0
    %124 = vmatprep.subr.mxu0 0.0
    %125 = vmatpush1.msra.mxu0 0.0
    %126 = vmatprep.subr.mxu0 0.0
    %127 = vmatpush1.msra.mxu0 0.0
    %128 = vmatprep.subr.mxu0 0.0
    %129 = vmatpush1.msra.mxu0 0.0
    %130 = vmatprep.subr.mxu0 0.0
    %131 = vmatpush1.msra.mxu0 0.0
    %132 = vmatprep.subr.mxu0 0.0
    %133 = vmatpush1.msra.mxu0 0.0
    %134 = vmatprep.subr.mxu0 0.0
    %135 = vmatpush1.msra.mxu0 0.0
    %136 = vmatprep.subr.mxu0 0.0
    %137 = vmatpush1.msra.mxu0 0.0
    %138 = vmatprep.subr.mxu0 0.0
    %139 = vmatpush1.msra.mxu0 0.0
    %140 = vmatprep.subr.mxu0 0.0
    %141 = vmatpush1.msra.mxu0 0.0
    %142 = vmatprep.subr.mxu0 0.0
    %143 = vmatpush1.msra.mxu0 0.0
    %144 = vmatprep.subr.mxu0 0.0
    %145 = vmatpush1.msra.mxu0 0.0
    %146 = vmatprep.mubr.f32.mxu0 0.0
    %147 = vmatmul.mubr.f32.gmra.mrb[0].mxu0 %v55
    %v148 = vpop.f32.mrb[0].mxu0
    %v149 = vadd.f32 %v80, %v148
    %v150 = vpop.f32.mrb[0].mxu0
    %151 = vmatprep.mubr.f32.mxu0 0.0
    %152 = vmatmul.mubr.f32.gmra.mrb[0].mxu0 %v56
    %v153 = vpop.f32.mrb[0].mxu0
    %v154 = vadd.f32 %v80, %v153
    %v155 = vpop.f32.mrb[0].mxu0
    %156 = vmatprep.mubr.f32.mxu0 0.0
    %157 = vmatmul.mubr.f32.gmra.mrb[0].mxu0 %v57
    %v158 = vpop.f32.mrb[0].mxu0
    %v159 = vadd.f32 %v80, %v158
    %v160 = vpop.f32.mrb[0].mxu0
    %161 = vmatprep.mubr.f32.mxu0 0.0
    %162 = vmatmul.mubr.f32.gmra.mrb[0].mxu0 %v58
    %v163 = vpop.f32.mrb[0].mxu0
    %v164 = vadd.f32 %v80, %v163
    %v165 = vpop.f32.mrb[0].mxu0
    %166 = vdwg.mxu0
    %167 = vst [vmem:[#allocation7] sm:$0xff] %v149
    %168 = vst [vmem:[#allocation7 + $0x8] sm:$0xff] %v154
    %169 = vst [vmem:[#allocation7 + $0x10] sm:$0xff] %v159
    %170 = vst [vmem:[#allocation7 + $0x18] sm:$0xff] %v164
    // Predicated region
    $region14: #{patch_embedding.2} parent=1 // pred_check
      _
    $region15: #{patch_embedding.2} parent=1 // pred_check_branch
      %172 = sbr.rel (0) target = $region17
    $region16: #{patch_embedding.2} parent=1 // pred_region
      %s174 = ssub.s32 512, 512
      %175 = vsyncadd [#allocation8], %s174
      %s176 = sshll.u32 [#allocation7], 4
      %s177 = int_to_ptr.vmem [resolvable:$true] %s176
      %182 = dma.vmem_to_hbm [thread:$0]  %s177, 512, %s4, [#allocation8], 128, 128, 8
    $region17: #{patch_embedding.2} parent=1 // pred_fallthru
      _
    // Predicated region
    $region18: #{patch_embedding.2} parent=1 // pred_check
      _
    $region19: #{patch_embedding.2} parent=1 // pred_check_branch
      %184 = sbr.rel (0) target = $region21
    $region20: #{patch_embedding.2} parent=1 // pred_region
      %185 = dma.done [#allocation8], 512
    $region21: #{patch_embedding.2} parent=1 // pred_fallthru
      _
    %186 = vsyncpa [#allocation8], 1

</llo_original>
